<compile_context>
chip_gen: v5e
topology: v5e:2x2
jax: 0.10.0
libtpu: 0.0.40
codegen_flags: <defaults>
</compile_context>

<pallas_src>
import functools

import jax
import jax.numpy as jnp
from jax.experimental import pallas as pl
from jax.experimental.pallas import tpu as pltpu


_LANE = 128
_TARGET_BLOCK_BYTES = 3 * 1024 * 1024    # ~2-4 MB per big block per grid step
_VMEM_BUDGET_BYTES = 40 * 1024 * 1024    # (2 in + 1 out) x 2 buffers working set
_VMEM_LIMIT_BYTES = 48 * 1024 * 1024     # scoped limit; safe on v7x (64 MiB VMEM)
_MAX_NB = 8                              # cap batch blocking (unrolled in-kernel loop)


def _round_up(x, m):
    return ((x + m - 1) // m) * m


def _largest_divisor_leq(n, k):
    k = max(1, min(n, k))
    for cand in range(k, 0, -1):
        if n % cand == 0:
            return cand
    return 1


def _plan_tiles(N, C, P, itemsize):
    """Pick (tile_p, num_t, p_pad, nb) from a per-grid-step byte target."""
    c_pad = _round_up(max(C, 1), 8)                    # sublane padding
    col_bytes = c_pad * itemsize
    p128 = _round_up(P, _LANE)

    # Keep (2 inputs + 1 output) x 2 pipeline buffers inside the VMEM budget.
    cap = max(_LANE, (_VMEM_BUDGET_BYTES // (6 * col_bytes)) // _LANE * _LANE)
    desired = max(_LANE, (_TARGET_BLOCK_BYTES // col_bytes) // _LANE * _LANE)
    desired = min(desired, cap, p128)

    num_t = -(-p128 // desired)                        # cdiv
    tile_p = _round_up(-(-p128 // num_t), _LANE)
    p_pad = tile_p * num_t

    # Batch blocking when one (C, tile_p) block is still below the byte target.
    blk_bytes = col_bytes * tile_p
    nb_desired = max(1, min(N, _MAX_NB,
                            _TARGET_BLOCK_BYTES // blk_bytes,
                            _VMEM_BUDGET_BYTES // (6 * blk_bytes)))
    nb = _largest_divisor_leq(N, nb_desired)
    return tile_p, num_t, p_pad, nb


# ---------------------------------------------------------------------------
# Kernel A: tiled GAP of (low + high) + fc -> fused fcs -> softmax over 2C.
# grid = (N, num_spatial_tiles); spatial axis is the reduction ("arbitrary")
# axis; the per-batch accumulator lives in VMEM scratch and is lane-parallel
# (no per-tile XLU reduce); the tiny dense/softmax epilogue runs only at the
# final tile.
# ---------------------------------------------------------------------------
def _attention_kernel(low_ref, high_ref, wfc_ref, bfc_ref, whl_ref, bhl_ref,
                      att_ref, acc_ref, *, inv_p):
    t = pl.program_id(1)

    @pl.when(t == 0)
    def _():
        acc_ref[...] = jnp.zeros_like(acc_ref)

    # Lane-parallel partial sums: VPU adds only in the inner loop.  Zero-pad
    # columns contribute nothing; we divide by the *original* pixel count.
    acc_ref[...] += (low_ref[0].astype(jnp.float32)
                     + high_ref[0].astype(jnp.float32))

    @pl.when(t == pl.num_programs(1) - 1)
    def _():
        gap = jnp.sum(acc_ref[...], axis=-1, keepdims=True) * inv_p     # (C, 1)
        # fc: Conv2d(C, d, 1) on a 1x1 map == dense layer, weights (d, C).
        fea_z = jnp.dot(wfc_ref[...], gap,
                        preferred_element_type=jnp.float32) + bfc_ref[...]   # (d, 1)
        # fcs[0]/fcs[1] fused into one stacked (2C, d) matmul; the softmax over
        # the 2C rows == softmax over cat([high_att, low_att], dim=1).
        hl = jnp.dot(whl_ref[...], fea_z,
                     preferred_element_type=jnp.float32) + bhl_ref[...]      # (2C, 1)
        m = jnp.max(hl, axis=0, keepdims=True)
        e = jnp.exp(hl - m)
        inv = pl.reciprocal(jnp.sum(e, axis=0, keepdims=True))
        att_ref[...] = (e * inv)[None]                                       # (1, 2C, 1)


# ---------------------------------------------------------------------------
# Kernel B: per-pixel hot path, native NCHW (channels on sublanes, pixels on
# lanes -> lane-dense stores).
#   x = high * high_att + low * low_att     (broadcast over pixels)
#   y = W_out @ x + b_out                    (1x1 conv == channel matmul)
# high_att / low_att are fully VMEM-resident (constant block index); the grid
# step only streams the big low/high/out blocks.
# ---------------------------------------------------------------------------
def _output_kernel(hatt_ref, latt_ref, low_ref, high_ref, wout_ref, bout_ref,
                   out_ref, *, nb):
    n0 = pl.program_id(1) * nb
    w = wout_ref[...]
    b = bout_ref[...].astype(jnp.float32)
    # nb is small and static; each iteration is a lane-dense (C, tile_p) slab.
    for i in range(nb):
        hi = high_ref[i]                                  # (C, TP), input dtype
        lo = low_ref[i]
        ha = hatt_ref[n0 + i].astype(hi.dtype)            # (C, 1), resident
        la = latt_ref[n0 + i].astype(lo.dtype)
        x = hi * ha + lo * la                             # (C, TP)
        y = jnp.dot(w, x, preferred_element_type=jnp.float32)
        out_ref[i] = (y + b).astype(out_ref.dtype)


def init_params(key, features, r=2, L=32):
    d = max(int(features / r), L)
    ks = jax.random.split(key, 8)

    def w(k, cout, cin):
        # PyTorch Conv2d(.,.,1) weight layout (Cout, Cin); y = w @ x + b
        return jax.random.normal(k, (cout, cin), jnp.float32) * 0.1

    def b(k, cout):
        return jax.random.normal(k, (cout, 1), jnp.float32) * 0.1

    return {
        "w_fc":  w(ks[0], d, features),        "b_fc":  b(ks[1], d),
        "w_hi":  w(ks[2], features, d),        "b_hi":  b(ks[3], features),
        "w_lo":  w(ks[4], features, d),        "b_lo":  b(ks[5], features),
        "w_out": w(ks[6], features, features), "b_out": b(ks[7], features),
    }


def sfconv_forward(low_nchw, high_nchw, params):
    N, C, H, W = low_nchw.shape
    P = H * W
    act_dtype = low_nchw.dtype
    itemsize = jnp.dtype(act_dtype).itemsize
    tile_p, num_t, p_pad, nb = _plan_tiles(N, C, P, itemsize)
    d = params["w_fc"].shape[0]

    # NCHW -> (N, C, P): free reshape, no HBM transpose.  Zero-pad the pixel
    # dim to a multiple of tile_p so stores stay lane-dense / unmasked and the
    # spatial pipeline keeps streaming even for non-multiple-of-128 spatials.
    low = low_nchw.reshape(N, C, P)
    high = high_nchw.reshape(N, C, P)
    if p_pad != P:
        low = jnp.pad(low, ((0, 0), (0, 0), (0, p_pad - P)))
        high = jnp.pad(high, ((0, 0), (0, 0), (0, p_pad - P)))

    # Stack fcs[0]/fcs[1] so the once-per-batch epilogue is a single matmul.
    w_hl = jnp.concatenate([params["w_hi"], params["w_lo"]], axis=0)   # (2C, d)
    b_hl = jnp.concatenate([params["b_hi"], params["b_lo"]], axis=0)   # (2C, 1)

    # --- kernel A: attention vectors (tiled GAP + fc + softmax) -----------
    att = pl.pallas_call(
        functools.partial(_attention_kernel, inv_p=1.0 / float(P)),
        out_shape=jax.ShapeDtypeStruct((N, 2 * C, 1), jnp.float32),
        grid_spec=pltpu.PrefetchScalarGridSpec(
            num_scalar_prefetch=0,
            grid=(N, num_t),
            in_specs=[
                pl.BlockSpec((1, C, tile_p), lambda n, t: (n, 0, t)),   # low
                pl.BlockSpec((1, C, tile_p), lambda n, t: (n, 0, t)),   # high
                pl.BlockSpec((d, C), lambda n, t: (0, 0)),              # w_fc
                pl.BlockSpec((d, 1), lambda n, t: (0, 0)),              # b_fc
                pl.BlockSpec((2 * C, d), lambda n, t: (0, 0)),          # w_hl
                pl.BlockSpec((2 * C, 1), lambda n, t: (0, 0)),          # b_hl
            ],
            out_specs=pl.BlockSpec((1, 2 * C, 1), lambda n, t: (n, 0, 0)),
            scratch_shapes=[pltpu.VMEM((C, tile_p), jnp.float32)],
        ),
        compiler_params=pltpu.CompilerParams(
            dimension_semantics=("parallel", "arbitrary"),
            vmem_limit_bytes=_VMEM_LIMIT_BYTES),
    )(low, high, params["w_fc"], params["b_fc"], w_hl, b_hl)

    hatt = att[:, :C, :]                                   # (N, C, 1) f32
    latt = att[:, C:, :]

    # Output 1x1-conv weight in the activation dtype (keeps MXU operands
    # matched and halves weight reads when activations are bf16).
    w_out = params["w_out"].astype(act_dtype)

    # --- kernel B: broadcast-mul + 1x1 output conv, tiled over pixels -----
    # Spatial tile axis leads the grid so megacore parallelism does not rely
    # on a tiny batch dim; default depth-2 pipelining (no extra buffering).
    out = pl.pallas_call(
        functools.partial(_output_kernel, nb=nb),
        out_shape=jax.ShapeDtypeStruct((N, C, p_pad), act_dtype),
        grid_spec=pltpu.PrefetchScalarGridSpec(
            num_scalar_prefetch=0,
            grid=(num_t, N // nb),
            in_specs=[
                pl.BlockSpec((N, C, 1), lambda t, n: (0, 0, 0)),        # high_att (resident)
                pl.BlockSpec((N, C, 1), lambda t, n: (0, 0, 0)),        # low_att  (resident)
                pl.BlockSpec((nb, C, tile_p), lambda t, n: (n, 0, t)),  # low
                pl.BlockSpec((nb, C, tile_p), lambda t, n: (n, 0, t)),  # high
                pl.BlockSpec((C, C), lambda t, n: (0, 0)),              # w_out
                pl.BlockSpec((C, 1), lambda t, n: (0, 0)),              # b_out
            ],
            out_specs=pl.BlockSpec((nb, C, tile_p), lambda t, n: (n, 0, t)),
        ),
        compiler_params=pltpu.CompilerParams(
            dimension_semantics=("parallel", "parallel"),
            vmem_limit_bytes=_VMEM_LIMIT_BYTES),
    )(hatt, latt, low, high, w_out, params["b_out"])

    if p_pad != P:
        out = out[:, :, :P]
    return out.reshape(N, C, H, W)


# Pure-JAX reference (same math, NCHW) used only for a correctness check.
def sfconv_ref(low, high, params):
    N, C, H, W = low.shape
    gap = jnp.mean(low + high, axis=(2, 3))                     # (N, C)
    fea_z = gap @ params["w_fc"].T + params["b_fc"][:, 0]       # (N, d)
    hi = fea_z @ params["w_hi"].T + params["b_hi"][:, 0]        # (N, C)
    lo = fea_z @ params["w_lo"].T + params["b_lo"][:, 0]        # (N, C)
    att = jax.nn.softmax(jnp.concatenate([hi, lo], axis=1), axis=1)
    hatt, latt = att[:, :C], att[:, C:]
    x = high * hatt[:, :, None, None] + low * latt[:, :, None, None]
    y = jnp.einsum("nchw,dc->ndhw", x, params["w_out"])
    return y + params["b_out"].reshape(1, C, 1, 1)


if __name__ == "__main__":
    key = jax.random.PRNGKey(0)
    k_low, k_high, k_params = jax.random.split(key, 3)

    N, C, H, W = 2, 4, 16, 16          # features=4, M=2, r=2, L=32 -> d=32
    low = jax.random.normal(k_low, (N, C, H, W), jnp.float32)
    high = jax.random.normal(k_high, (N, C, H, W), jnp.float32)
    params = init_params(k_params, C)

    out = sfconv_forward(low, high, params)
    out = jax.block_until_ready(out)

    ref = sfconv_ref(low, high, params)
    assert out.shape == (N, C, H, W)
    assert jnp.allclose(out, ref, atol=1e-4, rtol=1e-4), float(
        jnp.max(jnp.abs(out - ref)))

    print("KERNEL_OK")
</pallas_src>

<mosaic_0001>
module attributes {stable_mosaic.version = 11 : i64} {
  func.func @_attention_kernel(%arg0: i32, %arg1: i32, %arg2: memref<1x4x256xf32, #tpu.memory_space<vmem>>, %arg3: memref<1x4x256xf32, #tpu.memory_space<vmem>>, %arg4: memref<32x4xf32, #tpu.memory_space<vmem>>, %arg5: memref<32x1xf32, #tpu.memory_space<vmem>>, %arg6: memref<8x32xf32, #tpu.memory_space<vmem>>, %arg7: memref<8x1xf32, #tpu.memory_space<vmem>>, %arg8: memref<1x8x1xf32, #tpu.memory_space<vmem>>, %arg9: memref<4x256xf32, #tpu.memory_space<vmem>>) attributes {dimension_semantics = [#tpu.dimension_semantics<parallel>, #tpu.dimension_semantics<arbitrary>], iteration_bounds = array<i64: 2, 1>, scalar_prefetch = 0 : i64, scratch_operands = 1 : i64, tpu.core_type = #tpu.core_type<tc>, window_params = [{transform_indices = @transform_0, window_bounds = array<i64: 1, 4, 256>}, {transform_indices = @transform_1, window_bounds = array<i64: 1, 4, 256>}, {pipeline_mode = #tpu.pipeline_mode<synchronous>, transform_indices = @transform_2, window_bounds = array<i64: 32, 4>}, {pipeline_mode = #tpu.pipeline_mode<synchronous>, transform_indices = @transform_3, window_bounds = array<i64: 32, 1>}, {pipeline_mode = #tpu.pipeline_mode<synchronous>, transform_indices = @transform_4, window_bounds = array<i64: 8, 32>}, {pipeline_mode = #tpu.pipeline_mode<synchronous>, transform_indices = @transform_5, window_bounds = array<i64: 8, 1>}, {transform_indices = @transform_6, window_bounds = array<i64: 1, 8, 1>}]} {
    %c0_i32 = arith.constant 0 : i32
    %0 = arith.cmpi eq, %arg1, %c0_i32 : i32
    %1 = arith.extui %0 : i1 to i32
    %c0_i32_0 = arith.constant 0 : i32
    %2 = arith.cmpi ne, %1, %c0_i32_0 : i32
    scf.if %2 {
      %cst = arith.constant 0.000000e+00 : f32
      %14 = vector.broadcast %cst : f32 to vector<4x256xf32>
      %c0_12 = arith.constant 0 : index
      %c0_13 = arith.constant 0 : index
      %15 = vector.load %arg9[%c0_12, %c0_13] : memref<4x256xf32, #tpu.memory_space<vmem>>, vector<4x256xf32>
      tpu.vector_store %arg9[%c0_12, %c0_13], %14 {strides = array<i32>} : memref<4x256xf32, #tpu.memory_space<vmem>>, vector<4x256xf32>,
    } else {
    }
    %c0 = arith.constant 0 : index
    %c0_1 = arith.constant 0 : index
    %3 = vector.load %arg9[%c0, %c0_1] : memref<4x256xf32, #tpu.memory_space<vmem>>, vector<4x256xf32>
    %c0_2 = arith.constant 0 : index
    %c0_3 = arith.constant 0 : index
    %c0_4 = arith.constant 0 : index
    %4 = vector.load %arg2[%c0_2, %c0_3, %c0_4] : memref<1x4x256xf32, #tpu.memory_space<vmem>>, vector<1x4x256xf32>
    %5 = vector.shape_cast %4 : vector<1x4x256xf32> to vector<4x256xf32>
    %c0_5 = arith.constant 0 : index
    %c0_6 = arith.constant 0 : index
    %c0_7 = arith.constant 0 : index
    %6 = vector.load %arg3[%c0_5, %c0_6, %c0_7] : memref<1x4x256xf32, #tpu.memory_space<vmem>>, vector<1x4x256xf32>
    %7 = vector.shape_cast %6 : vector<1x4x256xf32> to vector<4x256xf32>
    %8 = arith.addf %5, %7 : vector<4x256xf32>
    %9 = arith.addf %3, %8 : vector<4x256xf32>
    %c0_8 = arith.constant 0 : index
    %c0_9 = arith.constant 0 : index
    %10 = vector.load %arg9[%c0_8, %c0_9] : memref<4x256xf32, #tpu.memory_space<vmem>>, vector<4x256xf32>
    tpu.vector_store %arg9[%c0_8, %c0_9], %9 {strides = array<i32>} : memref<4x256xf32, #tpu.memory_space<vmem>>, vector<4x256xf32>,
    %c0_i32_10 = arith.constant 0 : i32
    %11 = arith.cmpi eq, %arg1, %c0_i32_10 : i32
    %12 = arith.extui %11 : i1 to i32
    %c0_i32_11 = arith.constant 0 : i32
    %13 = arith.cmpi ne, %12, %c0_i32_11 : i32
    scf.if %13 {
      %c0_12 = arith.constant 0 : index
      %c0_13 = arith.constant 0 : index
      %14 = vector.load %arg9[%c0_12, %c0_13] : memref<4x256xf32, #tpu.memory_space<vmem>>, vector<4x256xf32>
      %cst = arith.constant dense<0.000000e+00> : vector<4xf32>
      %15 = vector.multi_reduction <add>, %14, %cst [1] : vector<4x256xf32> to vector<4xf32>
      %16 = vector.shape_cast %15 : vector<4xf32> to vector<4x1xf32>
      %cst_14 = arith.constant 3.906250e-03 : f32
      %17 = vector.broadcast %cst_14 : f32 to vector<4x1xf32>
      %18 = arith.mulf %16, %17 : vector<4x1xf32>
      %c0_15 = arith.constant 0 : index
      %c0_16 = arith.constant 0 : index
      %19 = vector.load %arg4[%c0_15, %c0_16] : memref<32x4xf32, #tpu.memory_space<vmem>>, vector<32x4xf32>
      %cst_17 = arith.constant dense<0.000000e+00> : vector<32x1xf32>
      %20 = tpu.matmul %19, %18, %cst_17 {dimension_numbers = #tpu.dot_dimension_numbers<[1], [0], [0], [1], [0, 0, 1, 1], [], []>} : vector<32x4xf32>, vector<4x1xf32>, vector<32x1xf32> -> vector<32x1xf32>
      %c0_18 = arith.constant 0 : index
      %c0_19 = arith.constant 0 : index
      %21 = vector.load %arg5[%c0_18, %c0_19] : memref<32x1xf32, #tpu.memory_space<vmem>>, vector<32x1xf32>
      %22 = arith.addf %20, %21 : vector<32x1xf32>
      %c0_20 = arith.constant 0 : index
      %c0_21 = arith.constant 0 : index
      %23 = vector.load %arg6[%c0_20, %c0_21] : memref<8x32xf32, #tpu.memory_space<vmem>>, vector<8x32xf32>
      %cst_22 = arith.constant dense<0.000000e+00> : vector<8x1xf32>
      %24 = tpu.matmul %23, %22, %cst_22 {dimension_numbers = #tpu.dot_dimension_numbers<[1], [0], [0], [1], [0, 0, 1, 1], [], []>} : vector<8x32xf32>, vector<32x1xf32>, vector<8x1xf32> -> vector<8x1xf32>
      %c0_23 = arith.constant 0 : index
      %c0_24 = arith.constant 0 : index
      %25 = vector.load %arg7[%c0_23, %c0_24] : memref<8x1xf32, #tpu.memory_space<vmem>>, vector<8x1xf32>
      %26 = arith.addf %24, %25 : vector<8x1xf32>
      %cst_25 = arith.constant dense<0xFF800000> : vector<1xf32>
      %27 = vector.multi_reduction <maximumf>, %26, %cst_25 [0] : vector<8x1xf32> to vector<1xf32>
      %28 = vector.shape_cast %27 : vector<1xf32> to vector<1x1xf32>
      %29 = vector.broadcast %28 : vector<1x1xf32> to vector<8x1xf32>
      %30 = arith.subf %26, %29 : vector<8x1xf32>
      %31 = math.exp %30 : vector<8x1xf32>
      %cst_26 = arith.constant dense<0.000000e+00> : vector<1xf32>
      %32 = vector.multi_reduction <add>, %31, %cst_26 [0] : vector<8x1xf32> to vector<1xf32>
      %33 = vector.shape_cast %32 : vector<1xf32> to vector<1x1xf32>
      %34 = tpu.reciprocal %33 : vector<1x1xf32> -> vector<1x1xf32>
      %35 = vector.broadcast %34 : vector<1x1xf32> to vector<8x1xf32>
      %36 = arith.mulf %31, %35 : vector<8x1xf32>
      %37 = vector.shape_cast %36 : vector<8x1xf32> to vector<1x8x1xf32>
      %c0_27 = arith.constant 0 : index
      %c0_28 = arith.constant 0 : index
      %c0_29 = arith.constant 0 : index
      %38 = vector.load %arg8[%c0_27, %c0_28, %c0_29] : memref<1x8x1xf32, #tpu.memory_space<vmem>>, vector<1x8x1xf32>
      tpu.vector_store %arg8[%c0_27, %c0_28, %c0_29], %37 {strides = array<i32>} : memref<1x8x1xf32, #tpu.memory_space<vmem>>, vector<1x8x1xf32>,
    } else {
    }
    return
  }
  func.func @transform_0(%arg0: i32, %arg1: i32) -> (i32, i32, i32) {
    %c0_i32 = arith.constant 0 : i32
    %c0_i32_0 = arith.constant 0 : i32
    return %arg0, %c0_i32, %arg1 : i32, i32, i32
  }
  func.func @transform_1(%arg0: i32, %arg1: i32) -> (i32, i32, i32) {
    %c0_i32 = arith.constant 0 : i32
    %c0_i32_0 = arith.constant 0 : i32
    return %arg0, %c0_i32, %arg1 : i32, i32, i32
  }
  func.func @transform_2(%arg0: i32, %arg1: i32) -> (i32, i32) {
    %c0_i32 = arith.constant 0 : i32
    %c0_i32_0 = arith.constant 0 : i32
    %c0_i32_1 = arith.constant 0 : i32
    return %c0_i32, %c0_i32_0 : i32, i32
  }
  func.func @transform_3(%arg0: i32, %arg1: i32) -> (i32, i32) {
    %c0_i32 = arith.constant 0 : i32
    %c0_i32_0 = arith.constant 0 : i32
    %c0_i32_1 = arith.constant 0 : i32
    return %c0_i32, %c0_i32_0 : i32, i32
  }
  func.func @transform_4(%arg0: i32, %arg1: i32) -> (i32, i32) {
    %c0_i32 = arith.constant 0 : i32
    %c0_i32_0 = arith.constant 0 : i32
    %c0_i32_1 = arith.constant 0 : i32
    return %c0_i32, %c0_i32_0 : i32, i32
  }
  func.func @transform_5(%arg0: i32, %arg1: i32) -> (i32, i32) {
    %c0_i32 = arith.constant 0 : i32
    %c0_i32_0 = arith.constant 0 : i32
    %c0_i32_1 = arith.constant 0 : i32
    return %c0_i32, %c0_i32_0 : i32, i32
  }
  func.func @transform_6(%arg0: i32, %arg1: i32) -> (i32, i32, i32) {
    %c0_i32 = arith.constant 0 : i32
    %c0_i32_0 = arith.constant 0 : i32
    %c0_i32_1 = arith.constant 0 : i32
    return %arg0, %c0_i32, %c0_i32_0 : i32, i32, i32
  }
}

</mosaic_0001>

<llo_original>
// kernel: tpu_custom_call.1
$region0: #{tpu_custom_call.1}
  #allocation0 [shape = 'u32[]', space=smem, size = 0x4, offset = 0x4, fixed_abs, tag = 'smem constant byte address 0x4 - core index']
  #allocation1 [shape = 'u32[72,128]{1,0:T(1,128)}', space=vmem, size = 0x9000, scoped, tag = 'internal scratch']
  #allocation2 [shape = 'f32[4,256]{1,0:T(4,128)}', space=vmem, size = 0x1000, scoped, tag = 'scratch operand']
  %s0 = inlined_call_operand.vmem [shape: f32[2,4,256], index: 0, kind: input, shape index: {}]
  %s1 = inlined_call_operand.vmem [shape: f32[2,4,256], index: 1, kind: input, shape index: {}]
  %s2 = inlined_call_operand.vmem [shape: f32[32,4], index: 2, kind: input, shape index: {}]
  %s3 = inlined_call_operand.vmem [shape: f32[32,1], index: 3, kind: input, shape index: {}]
  %s4 = inlined_call_operand.vmem [shape: f32[8,32], index: 4, kind: input, shape index: {}]
  %s5 = inlined_call_operand.vmem [shape: f32[8,1], index: 5, kind: input, shape index: {}]
  %s6 = inlined_call_operand.vmem [shape: f32[2,8,1], index: 6, kind: output, shape index: {}]
  %s7 = sld [smem:[#allocation0]]
  $region65: #{tpu_custom_call.1} parent=0
    _
  %s9 = ssub.s32 1, %s7
  %s10 = scalar_select 0, %s9, %s7
  loop: start=0, step=1, limit=4
  $region2: #{tpu_custom_call.1} parent=0 // loop_pre_header
    _
  $region3: #{tpu_custom_call.1} parent=0 // loop_header
    %s12 = sphi 0, %s16
    %p13 = scmp.ge.s32.totalorder %s12, 4
    %s19 = sphi 0, %s31
    %s20 = sphi 0, %s27
    %s21 = sphi 0, %s19
    %s22 = sphi 0, %s20
    %s23 = sphi 0, %s21
    %s24 = sphi 0, %s22
    %s36 = sphi 0, %s38
    %s39 = sphi 0, %s36
    %s40 = sphi 0, %s39
    %s56 = sphi 0, %s40
    %s64 = sphi 0, %s66
    %s67 = sphi 0, %s64
    %s68 = sphi 0, %s67
    %s84 = sphi 0, %s68
    %s88 = sphi 0, %s88
    %s90 = sphi 0, %s88
    %s91 = sphi 0, %s90
    %s105 = sphi 0, %s91
    %s109 = sphi 0, %s109
    %s111 = sphi 0, %s109
    %s112 = sphi 0, %s111
    %s126 = sphi 0, %s112
    %s130 = sphi 0, %s130
    %s132 = sphi 0, %s130
    %s133 = sphi 0, %s132
    %s147 = sphi 0, %s133
    %s151 = sphi 0, %s151
    %s153 = sphi 0, %s151
    %s154 = sphi 0, %s153
    %s168 = sphi 0, %s154
    %s174 = sphi 0, %s176
    %s177 = sphi 0, %s174
    %s178 = sphi 0, %s177
    %s194 = sphi 0, %s178
  $region4: #{tpu_custom_call.1} parent=0 // loop_header_branch
    %15 = sbr.rel (%p13) target = $region8
  $region5: #{tpu_custom_call.1} parent=0 // loop_body
    %s17 = ssub.s32 %s12, 1
    %s18 = ssub.s32 %s12, 2
    %s25 = sadd.s32 1, %s20
    %p26 = scmp.ge.s32.totalorder %s25, 1
    %s27 = scalar_select %p26, 0, %s25
    %s28 = sadd.s32 1, %s19
    %s29 = scalar_select %p26, %s28, %s19
    %p30 = scmp.ge.s32.totalorder %s29, 2
    %s31 = scalar_select %p30, 0, %s29
    %s32 = ssub.s32 %s19, %s31
    %s33 = ssub.s32 %s20, %s27
    %s34 = sor.u32 %s32, %s33
    %p35 = scmp.eq.s32.totalorder %s34, 0
    %s37 = sadd.s32 %s36, 1
    %s38 = scalar_select %p35, %s36, %s37
    %p41 = pneg %p35
    %p42 = scmp.eq.s32.totalorder %s12, 1
    %p43 = por %p41, %p42
    %p44 = scmp.ne.s32.totalorder %s36, %s39
    %p45 = scmp.eq.s32.totalorder %s12, 0
    %p46 = por %p44, %p45
    %p47 = scmp.ne.s32.totalorder %s36, %s39
    %p48 = scmp.eq.s32.totalorder %s17, 1
    %p49 = por %p47, %p48
    %p50 = scmp.ne.s32.totalorder %s39, %s40
    %p51 = scmp.eq.s32.totalorder %s17, 0
    %p52 = por %p50, %p51
    %p53 = scmp.ne.s32.totalorder %s39, %s40
    %p54 = scmp.eq.s32.totalorder %s18, 1
    %p55 = por %p53, %p54
    %p57 = scmp.ne.s32.totalorder %s40, %s56
    %p58 = scmp.eq.s32.totalorder %s18, 0
    %p59 = por %p57, %p58
    %s60 = ssub.s32 %s19, %s31
    %s61 = ssub.s32 %s20, %s27
    %s62 = sor.u32 %s60, %s61
    %p63 = scmp.eq.s32.totalorder %s62, 0
    %s65 = sadd.s32 %s64, 1
    %s66 = scalar_select %p63, %s64, %s65
    %p69 = pneg %p63
    %p70 = scmp.eq.s32.totalorder %s12, 1
    %p71 = por %p69, %p70
    %p72 = scmp.ne.s32.totalorder %s64, %s67
    %p73 = scmp.eq.s32.totalorder %s12, 0
    %p74 = por %p72, %p73
    %p75 = scmp.ne.s32.totalorder %s64, %s67
    %p76 = scmp.eq.s32.totalorder %s17, 1
    %p77 = por %p75, %p76
    %p78 = scmp.ne.s32.totalorder %s67, %s68
    %p79 = scmp.eq.s32.totalorder %s17, 0
    %p80 = por %p78, %p79
    %p81 = scmp.ne.s32.totalorder %s67, %s68
    %p82 = scmp.eq.s32.totalorder %s18, 1
    %p83 = por %p81, %p82
    %p85 = scmp.ne.s32.totalorder %s68, %s84
    %p86 = scmp.eq.s32.totalorder %s18, 0
    %p87 = por %p85, %p86
    %s89 = sadd.s32 %s88, 1
    %p92 = scmp.eq.s32.totalorder %s12, 1
    %p93 = scmp.ne.s32.totalorder %s88, %s90
    %p94 = scmp.eq.s32.totalorder %s12, 0
    %p95 = por %p93, %p94
    %p96 = scmp.ne.s32.totalorder %s88, %s90
    %p97 = scmp.eq.s32.totalorder %s17, 1
    %p98 = por %p96, %p97
    %p99 = scmp.ne.s32.totalorder %s90, %s91
    %p100 = scmp.eq.s32.totalorder %s17, 0
    %p101 = por %p99, %p100
    %p102 = scmp.ne.s32.totalorder %s90, %s91
    %p103 = scmp.eq.s32.totalorder %s18, 1
    %p104 = por %p102, %p103
    %p106 = scmp.ne.s32.totalorder %s91, %s105
    %p107 = scmp.eq.s32.totalorder %s18, 0
    %p108 = por %p106, %p107
    %s110 = sadd.s32 %s109, 1
    %p113 = scmp.eq.s32.totalorder %s12, 1
    %p114 = scmp.ne.s32.totalorder %s109, %s111
    %p115 = scmp.eq.s32.totalorder %s12, 0
    %p116 = por %p114, %p115
    %p117 = scmp.ne.s32.totalorder %s109, %s111
    %p118 = scmp.eq.s32.totalorder %s17, 1
    %p119 = por %p117, %p118
    %p120 = scmp.ne.s32.totalorder %s111, %s112
    %p121 = scmp.eq.s32.totalorder %s17, 0
    %p122 = por %p120, %p121
    %p123 = scmp.ne.s32.totalorder %s111, %s112
    %p124 = scmp.eq.s32.totalorder %s18, 1
    %p125 = por %p123, %p124
    %p127 = scmp.ne.s32.totalorder %s112, %s126
    %p128 = scmp.eq.s32.totalorder %s18, 0
    %p129 = por %p127, %p128
    %s131 = sadd.s32 %s130, 1
    %p134 = scmp.eq.s32.totalorder %s12, 1
    %p135 = scmp.ne.s32.totalorder %s130, %s132
    %p136 = scmp.eq.s32.totalorder %s12, 0
    %p137 = por %p135, %p136
    %p138 = scmp.ne.s32.totalorder %s130, %s132
    %p139 = scmp.eq.s32.totalorder %s17, 1
    %p140 = por %p138, %p139
    %p141 = scmp.ne.s32.totalorder %s132, %s133
    %p142 = scmp.eq.s32.totalorder %s17, 0
    %p143 = por %p141, %p142
    %p144 = scmp.ne.s32.totalorder %s132, %s133
    %p145 = scmp.eq.s32.totalorder %s18, 1
    %p146 = por %p144, %p145
    %p148 = scmp.ne.s32.totalorder %s133, %s147
    %p149 = scmp.eq.s32.totalorder %s18, 0
    %p150 = por %p148, %p149
    %s152 = sadd.s32 %s151, 1
    %p155 = scmp.eq.s32.totalorder %s12, 1
    %p156 = scmp.ne.s32.totalorder %s151, %s153
    %p157 = scmp.eq.s32.totalorder %s12, 0
    %p158 = por %p156, %p157
    %p159 = scmp.ne.s32.totalorder %s151, %s153
    %p160 = scmp.eq.s32.totalorder %s17, 1
    %p161 = por %p159, %p160
    %p162 = scmp.ne.s32.totalorder %s153, %s154
    %p163 = scmp.eq.s32.totalorder %s17, 0
    %p164 = por %p162, %p163
    %p165 = scmp.ne.s32.totalorder %s153, %s154
    %p166 = scmp.eq.s32.totalorder %s18, 1
    %p167 = por %p165, %p166
    %p169 = scmp.ne.s32.totalorder %s154, %s168
    %p170 = scmp.eq.s32.totalorder %s18, 0
    %p171 = por %p169, %p170
    %s172 = ssub.s32 %s19, %s31
    %p173 = scmp.eq.s32.totalorder %s172, 0
    %s175 = sadd.s32 %s174, 1
    %s176 = scalar_select %p173, %s174, %s175
    %p179 = pneg %p173
    %p180 = scmp.eq.s32.totalorder %s12, 1
    %p181 = por %p179, %p180
    %p182 = scmp.ne.s32.totalorder %s174, %s177
    %p183 = scmp.eq.s32.totalorder %s12, 0
    %p184 = por %p182, %p183
    %p185 = scmp.ne.s32.totalorder %s174, %s177
    %p186 = scmp.eq.s32.totalorder %s17, 1
    %p187 = por %p185, %p186
    %p188 = scmp.ne.s32.totalorder %s177, %s178
    %p189 = scmp.eq.s32.totalorder %s17, 0
    %p190 = por %p188, %p189
    %p191 = scmp.ne.s32.totalorder %s177, %s178
    %p192 = scmp.eq.s32.totalorder %s18, 1
    %p193 = por %p191, %p192
    %p195 = scmp.ne.s32.totalorder %s178, %s194
    %p196 = scmp.eq.s32.totalorder %s18, 0
    %p197 = por %p195, %p196
    %p198 = scmp.le.s32.totalorder 1, %s12
    %p199 = scmp.lt.s32.totalorder %s12, 3
    %p200 = pnand %p198, %p199
    %p201 = pneg %p200
    // Predicated region
    $region9: #{tpu_custom_call.1} parent=5 // pred_check
      _
    $region10: #{tpu_custom_call.1} parent=5 // pred_check_branch
      %203 = sbr.rel (%p200) target = $region12
    $region11: #{tpu_custom_call.1} parent=5 // pred_region
      %s204 = ssub.s32 %s12, 1
      // Predicated region
      $region13: #{tpu_custom_call.1} parent=11 // pred_check
        %p205 = pneg %p101
      $region14: #{tpu_custom_call.1} parent=11 // pred_check_branch
        %207 = sbr.rel (%p205) target = $region16
      $region15: #{tpu_custom_call.1} parent=11 // pred_region
        _
      $region16: #{tpu_custom_call.1} parent=11 // pred_fallthru
        _
      // Predicated region
      $region17: #{tpu_custom_call.1} parent=11 // pred_check
        %p208 = pneg %p122
      $region18: #{tpu_custom_call.1} parent=11 // pred_check_branch
        %210 = sbr.rel (%p208) target = $region20
      $region19: #{tpu_custom_call.1} parent=11 // pred_region
        _
      $region20: #{tpu_custom_call.1} parent=11 // pred_fallthru
        _
      // Predicated region
      $region21: #{tpu_custom_call.1} parent=11 // pred_check
        %p211 = pneg %p143
      $region22: #{tpu_custom_call.1} parent=11 // pred_check_branch
        %213 = sbr.rel (%p211) target = $region24
      $region23: #{tpu_custom_call.1} parent=11 // pred_region
        _
      $region24: #{tpu_custom_call.1} parent=11 // pred_fallthru
        _
      // Predicated region
      $region25: #{tpu_custom_call.1} parent=11 // pred_check
        %p214 = pneg %p164
      $region26: #{tpu_custom_call.1} parent=11 // pred_check_branch
        %216 = sbr.rel (%p214) target = $region28
      $region27: #{tpu_custom_call.1} parent=11 // pred_region
        _
      $region28: #{tpu_custom_call.1} parent=11 // pred_fallthru
        _
    $region12: #{tpu_custom_call.1} parent=5 // pred_fallthru
      _
    %p217 = scmp.lt.s32.totalorder %s12, 2
    // Predicated region
    $region29: #{tpu_custom_call.1} parent=5 // pred_check
      %p218 = pneg %p217
    $region30: #{tpu_custom_call.1} parent=5 // pred_check_branch
      %220 = sbr.rel (%p218) target = $region32
    $region31: #{tpu_custom_call.1} parent=5 // pred_region
      // Predicated region
      $region33: #{tpu_custom_call.1} parent=31 // pred_check
        %p221 = pneg %p46
      $region34: #{tpu_custom_call.1} parent=31 // pred_check_branch
        %223 = sbr.rel (%p221) target = $region36
      $region35: #{tpu_custom_call.1} parent=31 // pred_region
        %s224 = smul.u32 2, %s20
        %p225 = scmp.lt.s32.totalorder %s19, 1
        %s226 = scalar_select %p225, %s19, 1
        %p227 = scmp.lt.s32.totalorder %s224, 1
        %s228 = scalar_select %p227, %s224, 1
        %s229 = smul.addr %s226, 2
        %s230 = sadd.s32 %s228, %s229
        %s231 = smul.addr %s230, 4
        %s232 = scalar_lea.vmem %s0, %s231
        %s233 = smul.u32 2, %s20
      $region36: #{tpu_custom_call.1} parent=31 // pred_fallthru
        _
      // Predicated region
      $region37: #{tpu_custom_call.1} parent=31 // pred_check
        %p234 = pneg %p74
      $region38: #{tpu_custom_call.1} parent=31 // pred_check_branch
        %236 = sbr.rel (%p234) target = $region40
      $region39: #{tpu_custom_call.1} parent=31 // pred_region
        %s237 = smul.u32 2, %s20
        %p238 = scmp.lt.s32.totalorder %s19, 1
        %s239 = scalar_select %p238, %s19, 1
        %p240 = scmp.lt.s32.totalorder %s237, 1
        %s241 = scalar_select %p240, %s237, 1
        %s242 = smul.addr %s239, 2
        %s243 = sadd.s32 %s241, %s242
        %s244 = smul.addr %s243, 4
        %s245 = scalar_lea.vmem %s1, %s244
        %s246 = smul.u32 2, %s20
      $region40: #{tpu_custom_call.1} parent=31 // pred_fallthru
        _
    $region32: #{tpu_custom_call.1} parent=5 // pred_fallthru
      _
    %p247 = scmp.le.s32.totalorder 1, %s12
    %p248 = scmp.lt.s32.totalorder %s12, 3
    %p249 = pnand %p247, %p248
    %p250 = pneg %p249
    // Predicated region
    $region41: #{tpu_custom_call.1} parent=5 // pred_check
      _
    $region42: #{tpu_custom_call.1} parent=5 // pred_check_branch
      %252 = sbr.rel (%p249) target = $region44
    $region43: #{tpu_custom_call.1} parent=5 // pred_region
      %s253 = ssub.s32 %s12, 1
      %s254 = smul.u32 2, %s22
      %p255 = scmp.lt.s32.totalorder %s21, 1
      %s256 = scalar_select %p255, %s21, 1
      %p257 = scmp.lt.s32.totalorder %s254, 1
      %s258 = scalar_select %p257, %s254, 1
      %s259 = smul.addr %s256, 2
      %s260 = sadd.s32 %s258, %s259
      %s261 = smul.addr %s260, 4
      %s262 = scalar_lea.vmem %s0, %s261
      %p263 = pneg %p52
      %p264 = pneg %p49
      %s265 = smul.u32 2, %s22
      %p266 = scmp.lt.s32.totalorder %s21, 1
      %s267 = scalar_select %p266, %s21, 1
      %p268 = scmp.lt.s32.totalorder %s265, 1
      %s269 = scalar_select %p268, %s265, 1
      %s270 = smul.addr %s267, 2
      %s271 = sadd.s32 %s269, %s270
      %s272 = smul.addr %s271, 4
      %s273 = scalar_lea.vmem %s1, %s272
      %p274 = pneg %p80
      %p275 = pneg %p77
      %p276 = pneg %p101
      %p277 = pneg %p98
      %p278 = pneg %p122
      %p279 = pneg %p119
      %p280 = pneg %p143
      %p281 = pneg %p140
      %p282 = pneg %p164
      %p283 = pneg %p161
      %p284 = pneg %p190
      %p285 = pneg %p187
      %p286 = scmp.lt.s32.totalorder %s21, 1
      %s287 = scalar_select %p286, %s21, 1
      %s288 = smul.addr %s287, 8
      %s289 = scalar_lea.vmem %s6, %s288
      %s290 = smul.u32 2, %s22
      %p291 = scmp.lt.s32.totalorder %s21, 1
      %s292 = scalar_select %p291, %s21, 1
      %p293 = scmp.lt.s32.totalorder %s290, 1
      %s294 = scalar_select %p293, %s290, 1
      %s295 = smul.addr %s292, 2
      %s296 = sadd.s32 %s294, %s295
      %s297 = smul.addr %s296, 4
      %s298 = scalar_lea.vmem %s0, %s297
      %s299 = smul.u32 2, %s22
      %s300 = smul.u32 2, %s22
      %p301 = scmp.lt.s32.totalorder %s21, 1
      %s302 = scalar_select %p301, %s21, 1
      %p303 = scmp.lt.s32.totalorder %s300, 1
      %s304 = scalar_select %p303, %s300, 1
      %s305 = smul.addr %s302, 2
      %s306 = sadd.s32 %s304, %s305
      %s307 = smul.addr %s306, 4
      %s308 = scalar_lea.vmem %s1, %s307
      %s309 = smul.u32 2, %s22
      %p310 = scmp.lt.s32.totalorder %s21, 1
      %s311 = scalar_select %p310, %s21, 1
      %s312 = smul.addr %s311, 8
      %s313 = scalar_lea.vmem %s6, %s312
      %p314 = scmp.eq.s32.totalorder %s22, 0
      // Predicated region
      $region45: #{tpu_custom_call.1} parent=43 // pred_check
        %p315 = pneg %p314
      $region46: #{tpu_custom_call.1} parent=43 // pred_check_branch
        %317 = sbr.rel (%p315) target = $region48
      $region47: #{tpu_custom_call.1} parent=43 // pred_region
        %318 = vst [vmem:[#allocation2] sm:$0xff] 0.0
      $region48: #{tpu_custom_call.1} parent=43 // pred_fallthru
        _
      %v319 = vld [vmem:[#allocation2] sm:$0xff]
      %v320 = vld [vmem:[%s298] sm:$0xff]
      %v321 = vld [vmem:[%s308] sm:$0xff]
      %v322 = vadd.f32 %v320, %v321
      %v323 = vadd.f32 %v319, %v322
      %324 = vst [vmem:[#allocation2] sm:$0xff] %v323
      // Predicated region
      $region49: #{tpu_custom_call.1} parent=43 // pred_check
        %p325 = pneg %p314
      $region50: #{tpu_custom_call.1} parent=43 // pred_check_branch
        %327 = sbr.rel (%p325) target = $region52
      $region51: #{tpu_custom_call.1} parent=43 // pred_region
        %v328 = vld [vmem:[#allocation2] sm:$0xff]
        %330 = vst [vmem:[#allocation1] ss:$2 sm:$0xff] %v328
        %v331 = vld.sshfl [vmem:[#allocation1] sm:$0xff pattern:$0x75316420]
        %v332 = vld.sshfl [vmem:[#allocation1 + $0x8] sm:$0xff pattern:$0x75316420]
        %vm335 = vcmask 1043456
        %v336 = vsel %vm335, %v331, 0.0
        %v337 = vsel %vm335, %v332, 0.0
        %v338 = vadd.f32 %v336, %v337
        %339 = vadd.xlane.f32.xlu0 %v338
        %v340 = vpop.xlane.xlu0 %339
        %v341 = vmul.f32 %v340, 0.00390625
        %v342 = vld [vmem:[%s2] sm:$0xff]
        %v343 = vld [vmem:[%s2 + $0x8] sm:$0xff]
        %v344 = vld [vmem:[%s2 + $0x10] sm:$0xff]
        %v345 = vld [vmem:[%s2 + $0x18] sm:$0xff]
        %v346 = vld [vmem:[%s3] sm:$0xff]
        %v347 = vld [vmem:[%s3 + $0x8] sm:$0xff]
        %v348 = vld [vmem:[%s3 + $0x10] sm:$0xff]
        %v349 = vld [vmem:[%s3 + $0x18] sm:$0xff]
        %vm350 = vcmask 31744
        %v352 = vsel %vm350, %v342, 0
        %v355 = vsel %vm350, %v343, 0
        %v358 = vsel %vm350, %v344, 0
        %v361 = vsel %vm350, %v345, 0
        %v364 = vsel %vm335, %v341, 0
        %366 = vmatpush.msra.mxu0 0.0
        %367 = vmatpush.msra.mxu0 0.0
        %368 = vmatpush.msra.mxu0 0.0
        %369 = vmatpush.msra.mxu0 0.0
        %370 = vmatpush.msra.mxu0 0.0
        %371 = vmatpush.msra.mxu0 0.0
        %372 = vmatpush.msra.mxu0 0.0
        %373 = vmatpush.msra.mxu0 0.0
        %374 = vmatpush.msra.mxu0 0.0
        %375 = vmatpush.msra.mxu0 0.0
        %376 = vmatpush.msra.mxu0 0.0
        %377 = vmatpush.msra.mxu0 0.0
        %378 = vmatpush.msra.mxu0 0.0
        %379 = vmatpush.msra.mxu0 0.0
        %380 = vmatpush.msra.mxu0 0.0
        %381 = vmatpush.msra.mxu0 %v364
        %382 = vmatmul.f32.gmra.mxu0 %v352
        %v383 = vpop.f32.mrf.mxu0
        %v384 = vadd.f32 %v346, %v383
        %385 = vmatmul.f32.gmra.mxu0 %v355
        %v386 = vpop.f32.mrf.mxu0
        %v387 = vadd.f32 %v347, %v386
        %388 = vmatmul.f32.gmra.mxu0 %v358
        %v389 = vpop.f32.mrf.mxu0
        %v390 = vadd.f32 %v348, %v389
        %391 = vmatmul.f32.gmra.mxu0 %v361
        %v392 = vpop.f32.mrf.mxu0
        %v393 = vadd.f32 %v349, %v392
        %394 = vdwg.mxu0
        %v395 = vld [vmem:[%s4] sm:$0xff]
        %v396 = vld [vmem:[%s5] sm:$0xff]
        %vm397 = vcmask 261120
        %v399 = vsel %vm397, %v395, 0
        %401 = vmatpush.msra.mxu0 0.0
        %402 = vmatpush.msra.mxu0 0.0
        %403 = vmatpush.msra.mxu0 0.0
        %404 = vmatpush.msra.mxu0 0.0
        %405 = vmatpush.msra.mxu0 0.0
        %406 = vmatpush.msra.mxu0 0.0
        %407 = vmatpush.msra.mxu0 0.0
        %408 = vmatpush.msra.mxu0 0.0
        %409 = vmatpush.msra.mxu0 0.0
        %410 = vmatpush.msra.mxu0 0.0
        %411 = vmatpush.msra.mxu0 0.0
        %412 = vmatpush.msra.mxu0 0.0
        %413 = vmatpush.msra.mxu0 %v393
        %414 = vmatpush.msra.mxu0 %v390
        %415 = vmatpush.msra.mxu0 %v387
        %416 = vmatpush.msra.mxu0 %v384
        %417 = vmatmul.f32.gmra.mxu0 %v399
        %v418 = vpop.f32.mrf.mxu0
        %v419 = vadd.f32 %v396, %v418
        %420 = vdwg.mxu0
        %vm421 = vcmask 7168
        %v422 = vsel %vm421, %v419, -inf
        %v423 = vrot.slane %v422, 4
        %v424 = vmax.f32 %v422, %v423
        %v425 = vrot.slane %v424, 2
        %v426 = vmax.f32 %v424, %v425
        %v427 = vrot.slane %v426, 1
        %v428 = vmax.f32 %v426, %v427
        %v429 = vsub.f32 %v419, %v428
        %v430 = vmul.f32 %v429, 1.442695
        %v431 = vpow.pop %v430
        %v432 = vsel %vm421, %v431, 0.0
        %v433 = vrot.slane %v432, 4
        %v434 = vadd.f32 %v432, %v433
        %v435 = vrot.slane %v434, 2
        %v436 = vadd.f32 %v434, %v435
        %v437 = vrot.slane %v436, 1
        %v438 = vadd.f32 %v436, %v437
        %v439 = vrcp.pop %v438
        %v440 = vmul.f32 %v438, %v439
        %v441 = vsub.f32 1.0, %v440
        %v442 = vmul.f32 %v439, %v441
        %v443 = vadd.f32 %v439, %v442
        %vm444 = vweird.f32 %v438
        %vm445 = vweird.f32 %v439
        %vm446 = vmor %vm444, %vm445
        %v447 = vsel %vm446, %v439, %v443
        %v448 = vand.u32 2147483647, %v438
        %vm449 = vcmp.eq.f32.partialorder %v448, 8.507059e+37
        %v450 = vand.u32 %v438, 2147483648
        %v451 = vor.u32 1.1754944e-38, %v450
        %v452 = vsel %vm449, %v451, %v447
        %v453 = vmul.f32 %v431, %v452
        %454 = vst.msk [vmem:[%s313] sm:$0xff] %vm421, %v453
      $region52: #{tpu_custom_call.1} parent=43 // pred_fallthru
        _
      %p455 = scmp.lt.s32.totalorder %s21, 1
      %s456 = scalar_select %p455, %s21, 1
      %s457 = smul.addr %s456, 8
      %s458 = scalar_lea.vmem %s6, %s457
      // Predicated region
      $region53: #{tpu_custom_call.1} parent=43 // pred_check
        %p459 = pneg %p187
      $region54: #{tpu_custom_call.1} parent=43 // pred_check_branch
        %461 = sbr.rel (%p459) target = $region56
      $region55: #{tpu_custom_call.1} parent=43 // pred_region
        _
      $region56: #{tpu_custom_call.1} parent=43 // pred_fallthru
        _
    $region44: #{tpu_custom_call.1} parent=5 // pred_fallthru
      _
    %p462 = scmp.le.s32.totalorder 2, %s12
    // Predicated region
    $region57: #{tpu_custom_call.1} parent=5 // pred_check
      %p463 = pneg %p462
    $region58: #{tpu_custom_call.1} parent=5 // pred_check_branch
      %465 = sbr.rel (%p463) target = $region60
    $region59: #{tpu_custom_call.1} parent=5 // pred_region
      %s466 = ssub.s32 %s12, 2
      // Predicated region
      $region61: #{tpu_custom_call.1} parent=59 // pred_check
        %p467 = pneg %p193
      $region62: #{tpu_custom_call.1} parent=59 // pred_check_branch
        %469 = sbr.rel (%p467) target = $region64
      $region63: #{tpu_custom_call.1} parent=59 // pred_region
        %p470 = scmp.lt.s32.totalorder %s23, 1
        %s471 = scalar_select %p470, %s23, 1
        %s472 = smul.addr %s471, 8
        %s473 = scalar_lea.vmem %s6, %s472
      $region64: #{tpu_custom_call.1} parent=59 // pred_fallthru
        _
    $region60: #{tpu_custom_call.1} parent=5 // pred_fallthru
      _
  $region6: #{tpu_custom_call.1} parent=0 // loop_footer
    %s16 = sadd.s32 1, %s12
  $region7: #{tpu_custom_call.1} parent=0 // loop_footer_branch
    %11 = sbr.rel target = $region3
  $region8: #{tpu_custom_call.1} parent=0 // loop_exit
    _

</llo_original>
